<compile_context>
chip_gen: v6e
topology: v6e:2x2x1
jax: 0.10.0
libtpu: 0.0.40
codegen_flags: <defaults>
</compile_context>

<pallas_src>
import functools

import jax
import jax.numpy as jnp
from jax.experimental import pallas as pl
from jax.experimental.pallas import tpu as pltpu


# --------------------------------------------------------------------------
# Kernel
# --------------------------------------------------------------------------
def _rmsnorm_kernel(x_ref, w_ref, o_ref, *, eps, compute_f32):
    # x_ref: (tile_rows, d_model)   w_ref: (1, d_model) in the compute dtype
    x = x_ref[...]
    xf = x.astype(jnp.float32)
    # mean of squares along the hidden (last / lane) axis, in f32
    ms = jnp.mean(xf * xf, axis=-1, keepdims=True)          # (tile_rows, 1)
    inv_norm = jax.lax.rsqrt(ms + eps)                       # 1/sqrt(mean+eps)
    w = w_ref[...]                                           # (1, d_model)

    if compute_f32:
        # f32 path: f32 inputs, or any input on v5e (no native bf16 VPU).
        y = (xf * inv_norm) * w
    else:
        # Low-precision path (bf16 on v6e/v7x): keep the big
        # (tile_rows, d_model) elementwise work in the input dtype; only the
        # per-row statistics stay in f32.  Weight is already in x.dtype.
        y = (x * inv_norm.astype(x.dtype)) * w

    o_ref[...] = y.astype(o_ref.dtype)


# --------------------------------------------------------------------------
# Chip-aware sizing helpers
# --------------------------------------------------------------------------
def _round_up(v, m):
    return ((v + m - 1) // m) * m


def _tpu_generation_info():
    """Return (vmem_capacity_bytes, tensorcores_per_chip, prefer_f32_compute).

    Defensive: falls back to conservative (v7x-like) defaults if the query
    APIs are unavailable.
    """
    vmem_bytes = 64 << 20   # conservative default (v7x per-TC VMEM)
    num_tc = 1
    prefer_f32 = False
    try:
        info = pltpu.get_tpu_info()
        vmem_bytes = int(getattr(info, "vmem_capacity_bytes", vmem_bytes))
    except Exception:
        pass
    try:
        kind = jax.devices()[0].device_kind.lower()
        if "v7" in kind:
            num_tc = 2            # 2 TensorCores per chip on v7x
        if "v5" in kind and ("lite" in kind or "5e" in kind):
            prefer_f32 = True     # v5e VPU has no native bf16
    except Exception:
        pass
    return vmem_bytes, num_tc, prefer_f32


def _pick_tile_rows(rows, d_model, itemsize, vmem_capacity_bytes, num_tc):
    """Largest row tile whose block fits the chip-specific byte budget.

    Multiple of 16 so bf16 inputs pack sublanes cleanly; capped at 4096 rows
    (the byte budget is the real limiter); on 2-TC chips the tile is halved
    when it would otherwise swallow all rows in a single grid step.
    """
    # 16 MiB blocks on 128 MiB-VMEM parts (v5e/v6e), 8 MiB on v7x (64 MiB).
    block_budget = (16 << 20) if vmem_capacity_bytes >= (96 << 20) else (8 << 20)

    t = block_budget // max(1, d_model * itemsize)
    t = min(t, 4096)
    t = min(t, _round_up(rows, 16))
    t = max(t, 16)
    t = (t // 16) * 16

    # v7x: make sure the "parallel" grid axis has >= 2 steps so both
    # TensorCores stream (no effect on 1-TC chips).
    if num_tc >= 2 and t >= rows and rows > 32:
        t = max(16, _round_up((rows + 1) // 2, 16))

    return max(t, 8)


# --------------------------------------------------------------------------
# Wrapper
# --------------------------------------------------------------------------
def llama_rmsnorm(x, weight, eps=1e-05, tile_rows=None):
    """x: (..., d_model), weight: (d_model,). Returns same shape/dtype as x."""
    orig_shape = x.shape
    d_model = orig_shape[-1]
    rows = 1
    for s in orig_shape[:-1]:
        rows *= s
    x2d = x.reshape(rows, d_model)

    itemsize = jnp.dtype(x.dtype).itemsize
    vmem_cap, num_tc, prefer_f32 = _tpu_generation_info()

    if tile_rows is None:
        tile_rows = _pick_tile_rows(rows, d_model, itemsize, vmem_cap, num_tc)

    # Compute dtype: f32 for f32 inputs and on v5e; otherwise input dtype.
    compute_f32 = bool(prefer_f32 or x.dtype == jnp.float32)
    compute_dtype = jnp.float32 if compute_f32 else x.dtype

    # Weight: reshape + cast ONCE in the wrapper to the compute dtype; its
    # constant index_map keeps it resident in VMEM for the whole grid, so no
    # per-step convert runs inside the kernel.
    w2d = weight.reshape(1, d_model).astype(compute_dtype)

    grid = (pl.cdiv(rows, tile_rows),)

    # Scoped VMEM: double-buffered input tile + double-buffered output tile
    # + weight + headroom; clamp below physical VMEM minus compiler scratch
    # headroom (≈56 MiB ceiling on v7x, ≈120 MiB on v5e/v6e).
    block_bytes = tile_rows * d_model * itemsize
    w_bytes = d_model * jnp.dtype(compute_dtype).itemsize
    vmem_limit = 4 * block_bytes + w_bytes + (2 << 20)
    vmem_ceiling = max(16 << 20, vmem_cap - (8 << 20))
    vmem_limit = int(min(max(vmem_limit, 16 << 20), vmem_ceiling))

    kernel = functools.partial(_rmsnorm_kernel, eps=eps, compute_f32=compute_f32)

    # NOTE: pipeline_mode=pl.Buffered(3) on the x/out BlockSpecs is a possible
    # follow-up if an xprof trace shows exposed DMA at step boundaries.
    out = pl.pallas_call(
        kernel,
        out_shape=jax.ShapeDtypeStruct((rows, d_model), x.dtype),
        grid_spec=pltpu.PrefetchScalarGridSpec(
            num_scalar_prefetch=0,
            grid=grid,
            in_specs=[
                pl.BlockSpec((tile_rows, d_model), lambda i: (i, 0)),
                pl.BlockSpec((1, d_model), lambda i: (0, 0)),
            ],
            out_specs=pl.BlockSpec((tile_rows, d_model), lambda i: (i, 0)),
        ),
        compiler_params=pltpu.CompilerParams(
            dimension_semantics=("parallel",),  # shards rows across TCs on v7x
            vmem_limit_bytes=vmem_limit,
        ),
    )(x2d, w2d)

    return out.reshape(orig_shape)


# --------------------------------------------------------------------------
# Smoke test
# --------------------------------------------------------------------------
if __name__ == "__main__":
    key = jax.random.PRNGKey(0)
    batch, seq, d_model = 2, 8, 32
    x = jax.random.normal(key, (batch, seq, d_model), dtype=jnp.float32)
    # Deterministic parameter init: nn.Parameter(torch.ones(d_model))
    weight = jnp.ones((d_model,), dtype=jnp.float32)
    eps = 1e-05

    y = llama_rmsnorm(x, weight, eps=eps)
    y = jax.block_until_ready(y)

    # Pure-JAX reference: weight * x / sqrt(mean(x^2, -1) + eps)
    norm = jnp.sqrt(jnp.mean(x * x, axis=-1, keepdims=True) + eps)
    y_ref = weight * x / norm
    assert y.shape == x.shape and y.dtype == x.dtype
    assert jnp.allclose(y, y_ref, atol=1e-5, rtol=1e-5)

    print("KERNEL_OK")
</pallas_src>

<mosaic_0001>
module attributes {stable_mosaic.version = 11 : i64} {
  func.func @_rmsnorm_kernel(%arg0: i32, %arg1: memref<16x32xf32, #tpu.memory_space<vmem>>, %arg2: memref<1x32xf32, #tpu.memory_space<vmem>>, %arg3: memref<16x32xf32, #tpu.memory_space<vmem>>) attributes {dimension_semantics = [#tpu.dimension_semantics<parallel>], iteration_bounds = array<i64: 1>, scalar_prefetch = 0 : i64, scratch_operands = 0 : i64, tpu.core_type = #tpu.core_type<tc>, window_params = [{transform_indices = @transform_0, window_bounds = array<i64: 16, 32>}, {pipeline_mode = #tpu.pipeline_mode<synchronous>, transform_indices = @transform_1, window_bounds = array<i64: 1, 32>}, {transform_indices = @transform_2, window_bounds = array<i64: 16, 32>}]} {
    %c0 = arith.constant 0 : index
    %c0_0 = arith.constant 0 : index
    %0 = vector.load %arg1[%c0, %c0_0] : memref<16x32xf32, #tpu.memory_space<vmem>>, vector<16x32xf32>
    %1 = arith.mulf %0, %0 : vector<16x32xf32>
    %cst = arith.constant dense<0.000000e+00> : vector<16xf32>
    %2 = vector.multi_reduction <add>, %1, %cst [1] : vector<16x32xf32> to vector<16xf32>
    %3 = vector.shape_cast %2 : vector<16xf32> to vector<16x1xf32>
    %cst_1 = arith.constant 3.200000e+01 : f32
    %4 = vector.broadcast %cst_1 : f32 to vector<16x1xf32>
    %5 = arith.divf %3, %4 : vector<16x1xf32>
    %cst_2 = arith.constant 9.99999974E-6 : f32
    %6 = vector.broadcast %cst_2 : f32 to vector<16x1xf32>
    %7 = arith.addf %5, %6 : vector<16x1xf32>
    %8 = math.rsqrt %7 : vector<16x1xf32>
    %c0_3 = arith.constant 0 : index
    %c0_4 = arith.constant 0 : index
    %9 = vector.load %arg2[%c0_3, %c0_4] : memref<1x32xf32, #tpu.memory_space<vmem>>, vector<1x32xf32>
    %10 = vector.broadcast %8 : vector<16x1xf32> to vector<16x32xf32>
    %11 = arith.mulf %0, %10 : vector<16x32xf32>
    %12 = vector.broadcast %9 : vector<1x32xf32> to vector<16x32xf32>
    %13 = arith.mulf %11, %12 : vector<16x32xf32>
    %c0_5 = arith.constant 0 : index
    %c0_6 = arith.constant 0 : index
    %14 = vector.load %arg3[%c0_5, %c0_6] : memref<16x32xf32, #tpu.memory_space<vmem>>, vector<16x32xf32>
    tpu.vector_store %arg3[%c0_5, %c0_6], %13 {strides = array<i32>} : memref<16x32xf32, #tpu.memory_space<vmem>>, vector<16x32xf32>,
    return
  }
  func.func @transform_0(%arg0: i32) -> (i32, i32) {
    %c0_i32 = arith.constant 0 : i32
    %c0_i32_0 = arith.constant 0 : i32
    return %arg0, %c0_i32 : i32, i32
  }
  func.func @transform_1(%arg0: i32) -> (i32, i32) {
    %c0_i32 = arith.constant 0 : i32
    %c0_i32_0 = arith.constant 0 : i32
    %c0_i32_1 = arith.constant 0 : i32
    return %c0_i32, %c0_i32_0 : i32, i32
  }
  func.func @transform_2(%arg0: i32) -> (i32, i32) {
    %c0_i32 = arith.constant 0 : i32
    %c0_i32_0 = arith.constant 0 : i32
    return %arg0, %c0_i32 : i32, i32
  }
}

</mosaic_0001>

<llo_original>
// kernel: tpu_custom_call.1
$region0: #{tpu_custom_call.1}
  #allocation0 [shape = 'u32[]', space=smem, size = 0x4, offset = 0x4, fixed_abs, tag = 'smem constant byte address 0x4 - core index']
  #allocation1 [shape = 'u32[144,128]{1,0:T(1,128)}', space=vmem, size = 0x12000, scoped, tag = 'internal scratch']
  %s0 = inlined_call_operand.hbm [shape: f32[16,32], index: 0, kind: input, shape index: {}]
  %s1 = inlined_call_operand.vmem [shape: f32[1,32], index: 1, kind: input, shape index: {}]
  %s2 = inlined_call_operand.hbm [shape: f32[16,32], index: 2, kind: output, shape index: {}]
  %s3 = sld [smem:[#allocation0]]
  $region22: #{tpu_custom_call.1} parent=0
    _
  %s5 = ssub.s32 1, %s3
  %s6 = scalar_select 0, %s5, %s3
  $region1: #{tpu_custom_call.1} parent=0
    #allocation2 [shape = 'u8[8192]{0}', space=vmem, size = 0x2000, scoped, tag = 'input window, operand 0, single buffered']
    #allocation3 [shape = 's32[1]{0}', space=sflag, size = 0x4, scoped, tag = 'scoped memory for tpu_custom_call.1']
    #allocation4 [shape = 's32[1]{0}', space=sflag, size = 0x4, scoped, tag = 'scoped memory for tpu_custom_call.1']
    #allocation5 [shape = 'u8[8192]{0}', space=vmem, size = 0x2000, scoped, tag = 'output window, operand 0, single buffered']
    %7 = vsyncpa [#allocation3], 0
    %8 = vsyncpa [#allocation4], 0
    // Predicated region
    $region2: #{tpu_custom_call.1} parent=1 // pred_check
      _
    $region3: #{tpu_custom_call.1} parent=1 // pred_check_branch
      %10 = sbr.rel (0) target = $region5
    $region4: #{tpu_custom_call.1} parent=1 // pred_region
      %s12 = ssub.s32 256, 256
      %13 = vsyncadd [#allocation3], %s12
      %s14 = sshll.u32 [#allocation2], 4
      %s15 = int_to_ptr.vmem [resolvable:$true] %s14
      %20 = dma.hbm_to_vmem [thread:$0]  %s0, 256, %s15, [#allocation3], 128, 128, 8
    $region5: #{tpu_custom_call.1} parent=1 // pred_fallthru
      _
    // Predicated region
    $region6: #{tpu_custom_call.1} parent=1 // pred_check
      _
    $region7: #{tpu_custom_call.1} parent=1 // pred_check_branch
      %22 = sbr.rel (0) target = $region9
    $region8: #{tpu_custom_call.1} parent=1 // pred_region
      _
    $region9: #{tpu_custom_call.1} parent=1 // pred_fallthru
      _
    // Predicated region
    $region10: #{tpu_custom_call.1} parent=1 // pred_check
      _
    $region11: #{tpu_custom_call.1} parent=1 // pred_check_branch
      %24 = sbr.rel (0) target = $region13
    $region12: #{tpu_custom_call.1} parent=1 // pred_region
      %25 = dma.done [#allocation3], 256
    $region13: #{tpu_custom_call.1} parent=1 // pred_fallthru
      _
    %v26 = vld [vmem:[#allocation2] sm:$0xff]
    %v27 = vld [vmem:[#allocation2 + $0x8] sm:$0xff]
    %v28 = vmul.f32 %v26, %v26
    %v29 = vmul.f32 %v27, %v27
    %vm30 = vcmask 261120
    %v31 = vsel %vm30, %v28, 0.0
    %32 = vadd.xlane.f32.xlu0 %v31
    %v33 = vpop.xlane.xlu0 %32
    %v34 = vsel %vm30, %v29, 0.0
    %35 = vadd.xlane.f32.xlu0 %v34
    %v36 = vpop.xlane.xlu0 %35
    %v37 = vrcp.pop 32.0
    %v38 = vmul.f32 %v33, %v37
    %v39 = vmul.f32 %v36, %v37
    %v40 = vadd.f32 %v38, 1e-05
    %v41 = vadd.f32 %v39, 1e-05
    %v42 = vrsqrt.pop %v40
    %v43 = vrsqrt.pop %v41
    %v44 = vld [vmem:[%s1] sm:$0x1]
    %v45 = vmul.f32 %v26, %v42
    %v46 = vmul.f32 %v27, %v43
    %v48 = vlaneseq
    %v49 = vshrl.u32 %v48, 7
    %v50 = vsub.s32 0, %v49
    %v51 = vrot.slane %v44, %v50
    %v53 = vmul.f32 %v45, %v51
    %v54 = vmul.f32 %v46, %v51
    %55 = vst.msk [vmem:[#allocation5] sm:$0xff] %vm30, %v53
    %56 = vst.msk [vmem:[#allocation5 + $0x8] sm:$0xff] %vm30, %v54
    // Predicated region
    $region14: #{tpu_custom_call.1} parent=1 // pred_check
      _
    $region15: #{tpu_custom_call.1} parent=1 // pred_check_branch
      %58 = sbr.rel (0) target = $region17
    $region16: #{tpu_custom_call.1} parent=1 // pred_region
      %s60 = ssub.s32 256, 256
      %61 = vsyncadd [#allocation4], %s60
      %s62 = sshll.u32 [#allocation5], 4
      %s63 = int_to_ptr.vmem [resolvable:$true] %s62
      %68 = dma.vmem_to_hbm [thread:$0]  %s63, 256, %s2, [#allocation4], 128, 128, 8
    $region17: #{tpu_custom_call.1} parent=1 // pred_fallthru
      _
    // Predicated region
    $region18: #{tpu_custom_call.1} parent=1 // pred_check
      _
    $region19: #{tpu_custom_call.1} parent=1 // pred_check_branch
      %70 = sbr.rel (0) target = $region21
    $region20: #{tpu_custom_call.1} parent=1 // pred_region
      %71 = dma.done [#allocation4], 256
    $region21: #{tpu_custom_call.1} parent=1 // pred_fallthru
      _
    %72 = vsyncpa [#allocation3], 1
    %73 = vsyncpa [#allocation4], 1

</llo_original>
